<compile_context>
chip_gen: v7x
topology: tpu7x:2x2x1
jax: 0.10.0
libtpu: 0.0.40
codegen_flags: <defaults>
</compile_context>

<pallas_src>
import functools

import jax
import jax.numpy as jnp
from jax.experimental import pallas as pl
from jax.experimental.pallas import tpu as pltpu


_LANE = 128


def _round_up(x, m):
    return (x + m - 1) // m * m


def _vmem_capacity_bytes():
    """Physical VMEM per TensorCore (v5e/v6e: 128 MiB, v7x: 64 MiB)."""
    try:
        info = pltpu.get_tpu_info()
        cap = int(getattr(info, "vmem_capacity_bytes", 0) or 0)
        if cap > 0:
            return cap
    except Exception:
        pass
    return 64 * 1024 * 1024  # conservative fallback (v7x per-TC)


_VMEM_PHYS = _vmem_capacity_bytes()
# One streaming x block is double-buffered on the input AND output side
# (~4x resident), so vmem/6 leaves headroom for weights and scratch:
#   v7x  (64 MiB)  -> ~10.7 MiB blocks, vmem_limit 48 MiB
#   v5e/v6e (128)  -> ~21.3 MiB blocks, vmem_limit 96 MiB
_SLAB_BUDGET_BYTES = max(4 * 1024 * 1024, _VMEM_PHYS // 6)
_VMEM_LIMIT_BYTES = min(max(32 * 1024 * 1024, int(_VMEM_PHYS * 0.75)),
                        100 * 1024 * 1024)
# Two-pass spatial tile target (also 4x double-buffered in pass 2).
_TWO_PASS_TILE_BYTES = min(8 * 1024 * 1024,
                           max(2 * 1024 * 1024, _VMEM_PHYS // 12))


def _choose_batch_tile(batch, per_row_bytes):
    """Largest batch-divisor whose slab fits the VMEM budget, preferring
    >= 4 grid steps (real pipeline overlap on all generations, and feeds both
    TensorCores on v7x) as long as each block still moves >= 1 MiB."""
    fits = [d for d in range(1, batch + 1)
            if batch % d == 0 and d * per_row_bytes <= _SLAB_BUDGET_BYTES]
    for min_steps in (4, 2):
        cands = [d for d in fits
                 if batch // d >= min_steps and d * per_row_bytes >= (1 << 20)]
        if cands:
            return max(cands)
    return max(fits)  # d == 1 always qualifies on this code path


# ----------------------------------------------------------------------------
# Fast path: fused single-pass kernel (whole (Bt, C, HW) slab in VMEM).
# ----------------------------------------------------------------------------
def _ca_fused_kernel(x_ref, w1t_ref, b1_ref, w2t_ref, b2_ref, o_ref, *, hw):
    # Reductions straight from the ref with f32 accumulation.  The block's
    # last dim is the true HW extent, so the compiler masks the non-128 tail
    # for us (no in-kernel iota/select, no f32 slab copy).
    x = x_ref[...]                                            # (Bt, C, HW)
    sums = jnp.sum(x, axis=-1, dtype=jnp.float32)             # (Bt, C)
    maxes = jnp.max(x, axis=-1).astype(jnp.float32)           # (Bt, C)
    avgs = sums * (1.0 / hw)

    def mlp(v):                                               # (Bt, C) f32
        h = jnp.dot(v, w1t_ref[...],
                    preferred_element_type=jnp.float32) + b1_ref[...]
        h = jnp.where(h >= 0, h, 0.01 * h)                    # LeakyReLU(0.01)
        return jnp.dot(h, w2t_ref[...],
                       preferred_element_type=jnp.float32) + b2_ref[...]

    gate = jax.nn.sigmoid(mlp(avgs) + mlp(maxes))             # (Bt, C) f32
    gate = gate.astype(o_ref.dtype)[:, :, None]               # (Bt, C, 1)

    # Re-read the slab for the scale (keeps live ranges short) and multiply
    # in the input dtype.
    o_ref[...] = x_ref[...] * gate


def _channel_attention_fused(x_flat, w1, b1, w2, b2):
    B, C, HW = x_flat.shape
    hidden = w1.shape[0]
    itemsize = jnp.dtype(x_flat.dtype).itemsize

    # VMEM footprint estimate uses the lane-padded width.
    per_row_bytes = C * _round_up(HW, _LANE) * itemsize
    bt = _choose_batch_tile(B, per_row_bytes)

    # Pre-transpose weights in the wrapper so the kernel runs row-major
    # (stats-rows) matmuls with no in-kernel transposes.
    w1t = jnp.asarray(w1).T.astype(jnp.float32)               # (C, hidden)
    b1r = jnp.asarray(b1).reshape(1, hidden).astype(jnp.float32)
    w2t = jnp.asarray(w2).T.astype(jnp.float32)               # (hidden, C)
    b2r = jnp.asarray(b2).reshape(1, C).astype(jnp.float32)

    kernel = functools.partial(_ca_fused_kernel, hw=HW)

    cost = pl.CostEstimate(
        flops=int(3 * B * C * HW + 64 * B * C),
        transcendentals=int(B * C),
        bytes_accessed=int(2 * B * C * HW * itemsize))

    return pl.pallas_call(
        kernel,
        out_shape=jax.ShapeDtypeStruct((B, C, HW), x_flat.dtype),
        grid_spec=pltpu.PrefetchScalarGridSpec(
            num_scalar_prefetch=0,
            grid=(B // bt,),
            in_specs=[
                pl.BlockSpec((bt, C, HW), lambda i: (i, 0, 0)),
                pl.BlockSpec((C, hidden), lambda i: (0, 0)),
                pl.BlockSpec((1, hidden), lambda i: (0, 0)),
                pl.BlockSpec((hidden, C), lambda i: (0, 0)),
                pl.BlockSpec((1, C), lambda i: (0, 0)),
            ],
            out_specs=pl.BlockSpec((bt, C, HW), lambda i: (i, 0, 0)),
        ),
        compiler_params=pltpu.CompilerParams(
            dimension_semantics=("parallel",),
            vmem_limit_bytes=_VMEM_LIMIT_BYTES,
        ),
        cost_estimate=cost,
    )(x_flat, w1t, b1r, w2t, b2r)


# ----------------------------------------------------------------------------
# Fallback path: two-pass (reduce-then-scale) for slabs too big for VMEM.
# No wrapper padding: cdiv grid over spatial tiles; only the last tile masks.
# ----------------------------------------------------------------------------
def _ca_reduce_kernel(x_ref, w1_ref, b1_ref, w2_ref, b2_ref, gate_ref,
                      s_acc, m_acc, *, hw, thw):
    t = pl.program_id(1)
    last = pl.num_programs(1) - 1
    rem = hw % thw  # static; number of valid lanes in the last tile (0 == full)

    @pl.when(t == 0)
    def _init():
        s_acc[...] = jnp.zeros_like(s_acc)
        m_acc[...] = jnp.full_like(m_acc, -jnp.inf)

    def accumulate(xs, xm):
        s_acc[...] += jnp.sum(xs, axis=-1, keepdims=True, dtype=jnp.float32)
        m_acc[...] = jnp.maximum(
            m_acc[...],
            jnp.max(xm, axis=-1, keepdims=True).astype(jnp.float32))

    if rem != 0:
        # Full tiles: plain sum/max, no masking cost.
        @pl.when(t < last)
        def _full():
            x = x_ref[0]                                      # (C, thw)
            accumulate(x, x)

        # Last (overhanging) tile: lanes >= rem are garbage -> mask BOTH the
        # sum (zero) and the max (-inf).
        @pl.when(t == last)
        def _tail():
            x = x_ref[0].astype(jnp.float32)
            lane = jax.lax.broadcasted_iota(jnp.int32, x.shape, 1)
            valid = lane < rem
            accumulate(jnp.where(valid, x, 0.0),
                       jnp.where(valid, x, -jnp.inf))
    else:
        x = x_ref[0]
        accumulate(x, x)

    @pl.when(t == last)
    def _finalize():
        avg = s_acc[...] * (1.0 / hw)                         # (C, 1)
        mx = m_acc[...]                                       # (C, 1)

        def mlp(v):                                           # (C, 1)
            h = jnp.dot(w1_ref[...], v,
                        preferred_element_type=jnp.float32) + b1_ref[...]
            h = jnp.where(h >= 0, h, 0.01 * h)
            return jnp.dot(w2_ref[...], h,
                           preferred_element_type=jnp.float32) + b2_ref[...]

        gate_ref[0] = jax.nn.sigmoid(mlp(avg) + mlp(mx)).astype(gate_ref.dtype)


def _ca_scale_kernel(x_ref, gate_ref, o_ref):
    # Scale in the input dtype; out-of-bounds lanes of the last (overhanging)
    # tile are dropped by the pipeline's clamped write-back.
    o_ref[0] = x_ref[0] * gate_ref[0].astype(o_ref.dtype)


def _channel_attention_two_pass(x_flat, w1, b1, w2, b2, *, spatial_tile=None):
    B, C, HW = x_flat.shape
    hidden = w1.shape[0]
    itemsize = jnp.dtype(x_flat.dtype).itemsize

    # Spatial tile: VMEM-scaled (~5-8 MiB) per (C, thw) slab, lane-dense.
    if spatial_tile is None:
        thw = max(_LANE,
                  (_TWO_PASS_TILE_BYTES // (C * itemsize)) // _LANE * _LANE)
    else:
        thw = max(_LANE, _round_up(spatial_tile, _LANE))
    thw = min(thw, _round_up(HW, _LANE))
    n_t = pl.cdiv(HW, thw)

    w1f = jnp.asarray(w1).astype(jnp.float32)                 # (hidden, C)
    b1c = jnp.asarray(b1).reshape(hidden, 1).astype(jnp.float32)
    w2f = jnp.asarray(w2).astype(jnp.float32)                 # (C, hidden)
    b2c = jnp.asarray(b2).reshape(C, 1).astype(jnp.float32)

    # Pass 1: per-(batch, channel) avg/max reduction + fused MLP + sigmoid.
    reduce_kernel = functools.partial(_ca_reduce_kernel, hw=HW, thw=thw)
    gate = pl.pallas_call(
        reduce_kernel,
        out_shape=jax.ShapeDtypeStruct((B, C, 1), jnp.float32),
        grid_spec=pltpu.PrefetchScalarGridSpec(
            num_scalar_prefetch=0,
            grid=(B, n_t),
            in_specs=[
                pl.BlockSpec((1, C, thw), lambda b, t: (b, 0, t)),
                pl.BlockSpec((hidden, C), lambda b, t: (0, 0)),
                pl.BlockSpec((hidden, 1), lambda b, t: (0, 0)),
                pl.BlockSpec((C, hidden), lambda b, t: (0, 0)),
                pl.BlockSpec((C, 1), lambda b, t: (0, 0)),
            ],
            out_specs=pl.BlockSpec((1, C, 1), lambda b, t: (b, 0, 0)),
            scratch_shapes=[pltpu.VMEM((C, 1), jnp.float32),
                            pltpu.VMEM((C, 1), jnp.float32)],
        ),
        compiler_params=pltpu.CompilerParams(
            dimension_semantics=("parallel", "arbitrary"),
            vmem_limit_bytes=_VMEM_LIMIT_BYTES,
        ),
        cost_estimate=pl.CostEstimate(
            flops=int(2 * B * C * HW),
            transcendentals=int(B * C),
            bytes_accessed=int(B * C * HW * itemsize)),
    )(x_flat, w1f, b1c, w2f, b2c)

    # Pass 2: stream x again and apply the per-channel gate.
    out = pl.pallas_call(
        _ca_scale_kernel,
        out_shape=jax.ShapeDtypeStruct((B, C, HW), x_flat.dtype),
        grid_spec=pltpu.PrefetchScalarGridSpec(
            num_scalar_prefetch=0,
            grid=(B, n_t),
            in_specs=[
                pl.BlockSpec((1, C, thw), lambda b, t: (b, 0, t)),
                pl.BlockSpec((1, C, 1), lambda b, t: (b, 0, 0)),
            ],
            out_specs=pl.BlockSpec((1, C, thw), lambda b, t: (b, 0, t)),
        ),
        compiler_params=pltpu.CompilerParams(
            dimension_semantics=("parallel", "parallel"),
            vmem_limit_bytes=_VMEM_LIMIT_BYTES,
        ),
        cost_estimate=pl.CostEstimate(
            flops=int(B * C * HW),
            transcendentals=0,
            bytes_accessed=int(2 * B * C * HW * itemsize)),
    )(x_flat, gate)

    return out


# ----------------------------------------------------------------------------
# Public wrapper.
# ----------------------------------------------------------------------------
def channel_attention(x, w1, b1, w2, b2, *, force_two_pass=False,
                      spatial_tile=None):
    """x: (B, C, H, W).  Weights in PyTorch nn.Linear layout:
       w1 (8, C), b1 (8,), w2 (C, 8), b2 (C,)."""
    B, C, H, W = x.shape
    HW = H * W
    itemsize = jnp.dtype(x.dtype).itemsize
    x_flat = x.reshape(B, C, HW)

    per_row_bytes = C * _round_up(HW, _LANE) * itemsize
    if force_two_pass or per_row_bytes > _SLAB_BUDGET_BYTES:
        # Slab too large for VMEM: reduce-then-scale (3x traffic, always fits).
        out_flat = _channel_attention_two_pass(
            x_flat, w1, b1, w2, b2, spatial_tile=spatial_tile)
    else:
        out_flat = _channel_attention_fused(x_flat, w1, b1, w2, b2)
    return out_flat.reshape(B, C, H, W)


def _reference(x, w1, b1, w2, b2):
    # Pure-JAX reference matching the PyTorch forward exactly.
    avg = jnp.mean(x, axis=(2, 3))                            # (B, C)
    mx = jnp.max(x, axis=(2, 3))                              # (B, C)

    def mlp(v):                                               # v: (B, C)
        h = v @ w1.T + b1
        h = jnp.where(h >= 0, h, 0.01 * h)
        return h @ w2.T + b2

    out = mlp(avg) + mlp(mx)                                  # (B, C)
    gate = jax.nn.sigmoid(out)[:, :, None, None]
    return x * gate


if __name__ == "__main__":
    hidden = 8  # fixed by the module (Linear(input_channels, 8))
    B, C, H, W = 2, 4, 16, 16

    key = jax.random.PRNGKey(0)
    kx, k1, k2, k3, k4, kx2, kx3 = jax.random.split(key, 7)

    x = jax.random.normal(kx, (B, C, H, W), dtype=jnp.float32)
    # Deterministic synthetic weights (PyTorch nn.Linear layout).
    w1 = 0.3 * jax.random.normal(k1, (hidden, C), dtype=jnp.float32)
    b1 = 0.1 * jax.random.normal(k2, (hidden,), dtype=jnp.float32)
    w2 = 0.3 * jax.random.normal(k3, (C, hidden), dtype=jnp.float32)
    b2 = 0.1 * jax.random.normal(k4, (C,), dtype=jnp.float32)

    # 1) Fast fused path (lane-aligned spatial size).
    y = jax.block_until_ready(channel_attention(x, w1, b1, w2, b2))
    y_ref = _reference(x, w1, b1, w2, b2)
    assert y.shape == (B, C, H, W)
    assert jnp.allclose(y, y_ref, atol=1e-5, rtol=1e-5), "fused path mismatch"

    # 2) Fused path, H*W not a multiple of 128 (no wrapper pad / slice).
    x_odd = jax.random.normal(kx2, (B, C, 7, 7), dtype=jnp.float32)
    y_odd = jax.block_until_ready(channel_attention(x_odd, w1, b1, w2, b2))
    assert jnp.allclose(y_odd, _reference(x_odd, w1, b1, w2, b2),
                        atol=1e-5, rtol=1e-5), "unaligned fused path mismatch"

    # 3) Two-pass fallback, aligned (multi-tile reduction + finalize).
    y_tp = jax.block_until_ready(
        channel_attention(x, w1, b1, w2, b2,
                          force_two_pass=True, spatial_tile=128))
    assert jnp.allclose(y_tp, y_ref, atol=1e-5, rtol=1e-5), \
        "two-pass path mismatch"

    # 4) Two-pass fallback, unaligned tail (cdiv grid, masked last tile).
    x_un = jax.random.normal(kx3, (B, C, 20, 20), dtype=jnp.float32)
    y_un = jax.block_until_ready(
        channel_attention(x_un, w1, b1, w2, b2,
                          force_two_pass=True, spatial_tile=128))
    assert jnp.allclose(y_un, _reference(x_un, w1, b1, w2, b2),
                        atol=1e-5, rtol=1e-5), "unaligned two-pass mismatch"

    print("KERNEL_OK")
</pallas_src>

<mosaic_0001>
module attributes {stable_mosaic.version = 11 : i64} {
  func.func @_ca_fused_kernel(%arg0: i32, %arg1: memref<2x4x256xf32, #tpu.memory_space<vmem>>, %arg2: memref<4x8xf32, #tpu.memory_space<vmem>>, %arg3: memref<1x8xf32, #tpu.memory_space<vmem>>, %arg4: memref<8x4xf32, #tpu.memory_space<vmem>>, %arg5: memref<1x4xf32, #tpu.memory_space<vmem>>, %arg6: memref<2x4x256xf32, #tpu.memory_space<vmem>>) attributes {dimension_semantics = [#tpu.dimension_semantics<parallel>], iteration_bounds = array<i64: 1>, scalar_prefetch = 0 : i64, scratch_operands = 0 : i64, tpu.core_type = #tpu.core_type<tc>, window_params = [{transform_indices = @transform_0, window_bounds = array<i64: 2, 4, 256>}, {pipeline_mode = #tpu.pipeline_mode<synchronous>, transform_indices = @transform_1, window_bounds = array<i64: 4, 8>}, {pipeline_mode = #tpu.pipeline_mode<synchronous>, transform_indices = @transform_2, window_bounds = array<i64: 1, 8>}, {pipeline_mode = #tpu.pipeline_mode<synchronous>, transform_indices = @transform_3, window_bounds = array<i64: 8, 4>}, {pipeline_mode = #tpu.pipeline_mode<synchronous>, transform_indices = @transform_4, window_bounds = array<i64: 1, 4>}, {transform_indices = @transform_5, window_bounds = array<i64: 2, 4, 256>}]} {
    %c0 = arith.constant 0 : index
    %c0_0 = arith.constant 0 : index
    %c0_1 = arith.constant 0 : index
    %0 = vector.load %arg1[%c0, %c0_0, %c0_1] : memref<2x4x256xf32, #tpu.memory_space<vmem>>, vector<2x4x256xf32>
    %cst = arith.constant dense<0.000000e+00> : vector<2x4xf32>
    %1 = vector.multi_reduction <add>, %0, %cst [2] : vector<2x4x256xf32> to vector<2x4xf32>
    %cst_2 = arith.constant dense<0xFF800000> : vector<2x4xf32>
    %2 = vector.multi_reduction <maximumf>, %0, %cst_2 [2] : vector<2x4x256xf32> to vector<2x4xf32>
    %cst_3 = arith.constant 3.906250e-03 : f32
    %3 = vector.broadcast %cst_3 : f32 to vector<2x4xf32>
    %4 = arith.mulf %1, %3 : vector<2x4xf32>
    %c0_4 = arith.constant 0 : index
    %c0_5 = arith.constant 0 : index
    %5 = vector.load %arg2[%c0_4, %c0_5] : memref<4x8xf32, #tpu.memory_space<vmem>>, vector<4x8xf32>
    %cst_6 = arith.constant dense<0.000000e+00> : vector<2x8xf32>
    %6 = tpu.matmul %4, %5, %cst_6 {dimension_numbers = #tpu.dot_dimension_numbers<[1], [0], [0], [1], [0, 0, 1, 1], [], []>} : vector<2x4xf32>, vector<4x8xf32>, vector<2x8xf32> -> vector<2x8xf32>
    %c0_7 = arith.constant 0 : index
    %c0_8 = arith.constant 0 : index
    %7 = vector.load %arg3[%c0_7, %c0_8] : memref<1x8xf32, #tpu.memory_space<vmem>>, vector<1x8xf32>
    %8 = vector.broadcast %7 : vector<1x8xf32> to vector<2x8xf32>
    %9 = arith.addf %6, %8 : vector<2x8xf32>
    %cst_9 = arith.constant 0.000000e+00 : f32
    %10 = vector.broadcast %cst_9 : f32 to vector<2x8xf32>
    %11 = arith.cmpf oge, %9, %10 : vector<2x8xf32>
    %cst_10 = arith.constant 0.00999999977 : f32
    %12 = vector.broadcast %cst_10 : f32 to vector<2x8xf32>
    %13 = arith.mulf %12, %9 : vector<2x8xf32>
    %14 = arith.select %11, %9, %13 : vector<2x8xi1>, vector<2x8xf32>
    %c0_11 = arith.constant 0 : index
    %c0_12 = arith.constant 0 : index
    %15 = vector.load %arg4[%c0_11, %c0_12] : memref<8x4xf32, #tpu.memory_space<vmem>>, vector<8x4xf32>
    %cst_13 = arith.constant dense<0.000000e+00> : vector<2x4xf32>
    %16 = tpu.matmul %14, %15, %cst_13 {dimension_numbers = #tpu.dot_dimension_numbers<[1], [0], [0], [1], [0, 0, 1, 1], [], []>} : vector<2x8xf32>, vector<8x4xf32>, vector<2x4xf32> -> vector<2x4xf32>
    %c0_14 = arith.constant 0 : index
    %c0_15 = arith.constant 0 : index
    %17 = vector.load %arg5[%c0_14, %c0_15] : memref<1x4xf32, #tpu.memory_space<vmem>>, vector<1x4xf32>
    %18 = vector.broadcast %17 : vector<1x4xf32> to vector<2x4xf32>
    %19 = arith.addf %16, %18 : vector<2x4xf32>
    %c0_16 = arith.constant 0 : index
    %c0_17 = arith.constant 0 : index
    %20 = vector.load %arg2[%c0_16, %c0_17] : memref<4x8xf32, #tpu.memory_space<vmem>>, vector<4x8xf32>
    %cst_18 = arith.constant dense<0.000000e+00> : vector<2x8xf32>
    %21 = tpu.matmul %2, %20, %cst_18 {dimension_numbers = #tpu.dot_dimension_numbers<[1], [0], [0], [1], [0, 0, 1, 1], [], []>} : vector<2x4xf32>, vector<4x8xf32>, vector<2x8xf32> -> vector<2x8xf32>
    %c0_19 = arith.constant 0 : index
    %c0_20 = arith.constant 0 : index
    %22 = vector.load %arg3[%c0_19, %c0_20] : memref<1x8xf32, #tpu.memory_space<vmem>>, vector<1x8xf32>
    %23 = vector.broadcast %22 : vector<1x8xf32> to vector<2x8xf32>
    %24 = arith.addf %21, %23 : vector<2x8xf32>
    %cst_21 = arith.constant 0.000000e+00 : f32
    %25 = vector.broadcast %cst_21 : f32 to vector<2x8xf32>
    %26 = arith.cmpf oge, %24, %25 : vector<2x8xf32>
    %cst_22 = arith.constant 0.00999999977 : f32
    %27 = vector.broadcast %cst_22 : f32 to vector<2x8xf32>
    %28 = arith.mulf %27, %24 : vector<2x8xf32>
    %29 = arith.select %26, %24, %28 : vector<2x8xi1>, vector<2x8xf32>
    %c0_23 = arith.constant 0 : index
    %c0_24 = arith.constant 0 : index
    %30 = vector.load %arg4[%c0_23, %c0_24] : memref<8x4xf32, #tpu.memory_space<vmem>>, vector<8x4xf32>
    %cst_25 = arith.constant dense<0.000000e+00> : vector<2x4xf32>
    %31 = tpu.matmul %29, %30, %cst_25 {dimension_numbers = #tpu.dot_dimension_numbers<[1], [0], [0], [1], [0, 0, 1, 1], [], []>} : vector<2x8xf32>, vector<8x4xf32>, vector<2x4xf32> -> vector<2x4xf32>
    %c0_26 = arith.constant 0 : index
    %c0_27 = arith.constant 0 : index
    %32 = vector.load %arg5[%c0_26, %c0_27] : memref<1x4xf32, #tpu.memory_space<vmem>>, vector<1x4xf32>
    %33 = vector.broadcast %32 : vector<1x4xf32> to vector<2x4xf32>
    %34 = arith.addf %31, %33 : vector<2x4xf32>
    %35 = arith.addf %19, %34 : vector<2x4xf32>
    %36 = arith.negf %35 : vector<2x4xf32>
    %37 = math.exp %36 : vector<2x4xf32>
    %cst_28 = arith.constant 1.000000e+00 : f32
    %38 = vector.broadcast %cst_28 : f32 to vector<2x4xf32>
    %39 = arith.addf %38, %37 : vector<2x4xf32>
    %40 = arith.divf %38, %39 : vector<2x4xf32>
    %41 = vector.shape_cast %40 : vector<2x4xf32> to vector<2x4x1xf32>
    %c0_29 = arith.constant 0 : index
    %c0_30 = arith.constant 0 : index
    %c0_31 = arith.constant 0 : index
    %42 = vector.load %arg1[%c0_29, %c0_30, %c0_31] : memref<2x4x256xf32, #tpu.memory_space<vmem>>, vector<2x4x256xf32>
    %43 = vector.broadcast %41 : vector<2x4x1xf32> to vector<2x4x256xf32>
    %44 = arith.mulf %42, %43 : vector<2x4x256xf32>
    %c0_32 = arith.constant 0 : index
    %c0_33 = arith.constant 0 : index
    %c0_34 = arith.constant 0 : index
    %45 = vector.load %arg6[%c0_32, %c0_33, %c0_34] : memref<2x4x256xf32, #tpu.memory_space<vmem>>, vector<2x4x256xf32>
    tpu.vector_store %arg6[%c0_32, %c0_33, %c0_34], %44 {strides = array<i32>} : memref<2x4x256xf32, #tpu.memory_space<vmem>>, vector<2x4x256xf32>,
    return
  }
  func.func @transform_0(%arg0: i32) -> (i32, i32, i32) {
    %c0_i32 = arith.constant 0 : i32
    %c0_i32_0 = arith.constant 0 : i32
    %c0_i32_1 = arith.constant 0 : i32
    return %arg0, %c0_i32, %c0_i32_0 : i32, i32, i32
  }
  func.func @transform_1(%arg0: i32) -> (i32, i32) {
    %c0_i32 = arith.constant 0 : i32
    %c0_i32_0 = arith.constant 0 : i32
    %c0_i32_1 = arith.constant 0 : i32
    return %c0_i32, %c0_i32_0 : i32, i32
  }
  func.func @transform_2(%arg0: i32) -> (i32, i32) {
    %c0_i32 = arith.constant 0 : i32
    %c0_i32_0 = arith.constant 0 : i32
    %c0_i32_1 = arith.constant 0 : i32
    return %c0_i32, %c0_i32_0 : i32, i32
  }
  func.func @transform_3(%arg0: i32) -> (i32, i32) {
    %c0_i32 = arith.constant 0 : i32
    %c0_i32_0 = arith.constant 0 : i32
    %c0_i32_1 = arith.constant 0 : i32
    return %c0_i32, %c0_i32_0 : i32, i32
  }
  func.func @transform_4(%arg0: i32) -> (i32, i32) {
    %c0_i32 = arith.constant 0 : i32
    %c0_i32_0 = arith.constant 0 : i32
    %c0_i32_1 = arith.constant 0 : i32
    return %c0_i32, %c0_i32_0 : i32, i32
  }
  func.func @transform_5(%arg0: i32) -> (i32, i32, i32) {
    %c0_i32 = arith.constant 0 : i32
    %c0_i32_0 = arith.constant 0 : i32
    %c0_i32_1 = arith.constant 0 : i32
    return %arg0, %c0_i32, %c0_i32_0 : i32, i32, i32
  }
}

</mosaic_0001>

<llo_original>
// kernel: tpu_custom_call.1
$region0: #{tpu_custom_call.1}
  #allocation0 [shape = 'u32[]', space=smem, size = 0x4, offset = 0x4, fixed_abs, tag = 'smem constant byte address 0x4 - core index']
  #allocation1 [shape = 'u32[144,128]{1,0:T(1,128)}', space=vmem, size = 0x12000, scoped, tag = 'internal scratch']
  %s0 = inlined_call_operand.hbm [shape: f32[2,4,256], index: 0, kind: input, shape index: {}]
  %s1 = inlined_call_operand.vmem [shape: f32[4,8], index: 1, kind: input, shape index: {}]
  %s2 = inlined_call_operand.vmem [shape: f32[1,8], index: 2, kind: input, shape index: {}]
  %s3 = inlined_call_operand.vmem [shape: f32[8,4], index: 3, kind: input, shape index: {}]
  %s4 = inlined_call_operand.vmem [shape: f32[1,4], index: 4, kind: input, shape index: {}]
  %s5 = inlined_call_operand.hbm [shape: f32[2,4,256], index: 5, kind: output, shape index: {}]
  %s6 = sld [smem:[#allocation0]]
  $region34: #{tpu_custom_call.1} parent=0
    _
  %s8 = ssub.s32 1, %s6
  %s9 = scalar_select 0, %s8, %s6
  $region1: #{tpu_custom_call.1} parent=0
    #allocation2 [shape = 'u8[8192]{0}', space=vmem, size = 0x2000, scoped, tag = 'input window, operand 0, single buffered']
    #allocation3 [shape = 's32[1]{0}', space=sflag, size = 0x4, scoped, tag = 'scoped memory for tpu_custom_call.1']
    #allocation4 [shape = 's32[1]{0}', space=sflag, size = 0x4, scoped, tag = 'scoped memory for tpu_custom_call.1']
    #allocation5 [shape = 'u8[8192]{0}', space=vmem, size = 0x2000, scoped, tag = 'output window, operand 0, single buffered']
    %10 = vsyncpa [#allocation3], 0
    %11 = vsyncpa [#allocation4], 0
    // Predicated region
    $region2: #{tpu_custom_call.1} parent=1 // pred_check
      _
    $region3: #{tpu_custom_call.1} parent=1 // pred_check_branch
      %13 = sbr.rel (0) target = $region5
    $region4: #{tpu_custom_call.1} parent=1 // pred_region
      %s15 = ssub.s32 256, 256
      %16 = vsyncadd [#allocation3], %s15
      %s17 = sshll.u32 [#allocation2], 4
      %s18 = int_to_ptr.vmem [resolvable:$true] %s17
      %23 = dma.hbm_to_vmem [thread:$0]  %s0, 256, %s18, [#allocation3], 128, 128, 8
    $region5: #{tpu_custom_call.1} parent=1 // pred_fallthru
      _
    // Predicated region
    $region6: #{tpu_custom_call.1} parent=1 // pred_check
      _
    $region7: #{tpu_custom_call.1} parent=1 // pred_check_branch
      %25 = sbr.rel (0) target = $region9
    $region8: #{tpu_custom_call.1} parent=1 // pred_region
      _
    $region9: #{tpu_custom_call.1} parent=1 // pred_fallthru
      _
    // Predicated region
    $region10: #{tpu_custom_call.1} parent=1 // pred_check
      _
    $region11: #{tpu_custom_call.1} parent=1 // pred_check_branch
      %27 = sbr.rel (0) target = $region13
    $region12: #{tpu_custom_call.1} parent=1 // pred_region
      _
    $region13: #{tpu_custom_call.1} parent=1 // pred_fallthru
      _
    // Predicated region
    $region14: #{tpu_custom_call.1} parent=1 // pred_check
      _
    $region15: #{tpu_custom_call.1} parent=1 // pred_check_branch
      %29 = sbr.rel (0) target = $region17
    $region16: #{tpu_custom_call.1} parent=1 // pred_region
      _
    $region17: #{tpu_custom_call.1} parent=1 // pred_fallthru
      _
    // Predicated region
    $region18: #{tpu_custom_call.1} parent=1 // pred_check
      _
    $region19: #{tpu_custom_call.1} parent=1 // pred_check_branch
      %31 = sbr.rel (0) target = $region21
    $region20: #{tpu_custom_call.1} parent=1 // pred_region
      _
    $region21: #{tpu_custom_call.1} parent=1 // pred_fallthru
      _
    // Predicated region
    $region22: #{tpu_custom_call.1} parent=1 // pred_check
      _
    $region23: #{tpu_custom_call.1} parent=1 // pred_check_branch
      %33 = sbr.rel (0) target = $region25
    $region24: #{tpu_custom_call.1} parent=1 // pred_region
      %34 = dma.done [#allocation3], 256
    $region25: #{tpu_custom_call.1} parent=1 // pred_fallthru
      _
    %v35 = vld [vmem:[#allocation2] sm:$0xff]
    %v36 = vld [vmem:[#allocation2 + $0x8] sm:$0xff]
    %v39 = vcombine.high %v35, %v35
    %v40 = vcombine.high %v36, %v36
    %vm43 = vcmask 1043456
    %v44 = vsel %vm43, %v35, 0.0
    %v45 = vsel %vm43, %v39, 0.0
    %v46 = vadd.f32 %v44, %v45
    %47 = vadd.xlane.f32.xlu0 %v46
    %v48 = vpop.xlane.xlu0 %47
    %v49 = vsel %vm43, %v36, 0.0
    %v50 = vsel %vm43, %v40, 0.0
    %v51 = vadd.f32 %v49, %v50
    %52 = vadd.xlane.f32.xlu0 %v51
    %v53 = vpop.xlane.xlu0 %52
    %v54 = vsel %vm43, %v35, -inf
    %v55 = vsel %vm43, %v39, -inf
    %v56 = vmax.f32 %v54, %v55
    %57 = vmax.xlane.f32.xlu0 %v56
    %v58 = vpop.xlane.xlu0 %57
    %v59 = vsel %vm43, %v36, -inf
    %v60 = vsel %vm43, %v40, -inf
    %v61 = vmax.f32 %v59, %v60
    %62 = vmax.xlane.f32.xlu0 %v61
    %v63 = vpop.xlane.xlu0 %62
    %v64 = vmul.f32 %v48, 0.00390625
    %v65 = vmul.f32 %v53, 0.00390625
    %v66 = vld [vmem:[%s1] sm:$0xf]
    %v67 = vld [vmem:[%s2] sm:$0x1]
    %v69 = vlaneseq
    %v70 = vshrl.u32 %v69, 7
    %v71 = vsub.s32 0, %v70
    %v72 = vrot.slane %v67, %v71
    %v76 = vlaneseq
    %v77 = vand.u32 %v76, 127
    %v78 = vlaneseq
    %v79 = vshrl.u32 %v78, 7
    %v80 = vsub.s32 %v77, %v79
    %v81 = vrot.slane %v64, %v80
    %v82 = vlaneseq
    %v83 = vshrl.u32 %v82, 7
    %v84 = vsub.s32 %v77, %v83
    %v85 = vrot.slane %v65, %v84
    %vm86 = vcmask 1041409
    %v87 = vsel %vm86, %v85, %v81
    %vm88 = vcmask 31744
    %v89 = vsel %vm88, %v87, 0
    %v92 = vsel %vm43, %v66, 0
    %94 = vmatprep.subr.mxu0 0.0
    %95 = vmatpush1.msra.mxu0 %v92
    %96 = vmatprep.subr.mxu0 0.0
    %97 = vmatpush1.msra.mxu0 0.0
    %98 = vmatprep.subr.mxu0 0.0
    %99 = vmatpush1.msra.mxu0 0.0
    %100 = vmatprep.subr.mxu0 0.0
    %101 = vmatpush1.msra.mxu0 0.0
    %102 = vmatprep.subr.mxu0 0.0
    %103 = vmatpush1.msra.mxu0 0.0
    %104 = vmatprep.subr.mxu0 0.0
    %105 = vmatpush1.msra.mxu0 0.0
    %106 = vmatprep.subr.mxu0 0.0
    %107 = vmatpush1.msra.mxu0 0.0
    %108 = vmatprep.subr.mxu0 0.0
    %109 = vmatpush1.msra.mxu0 0.0
    %110 = vmatprep.subr.mxu0 0.0
    %111 = vmatpush1.msra.mxu0 0.0
    %112 = vmatprep.subr.mxu0 0.0
    %113 = vmatpush1.msra.mxu0 0.0
    %114 = vmatprep.subr.mxu0 0.0
    %115 = vmatpush1.msra.mxu0 0.0
    %116 = vmatprep.subr.mxu0 0.0
    %117 = vmatpush1.msra.mxu0 0.0
    %118 = vmatprep.subr.mxu0 0.0
    %119 = vmatpush1.msra.mxu0 0.0
    %120 = vmatprep.subr.mxu0 0.0
    %121 = vmatpush1.msra.mxu0 0.0
    %122 = vmatprep.subr.mxu0 0.0
    %123 = vmatpush1.msra.mxu0 0.0
    %124 = vmatprep.subr.mxu0 0.0
    %125 = vmatpush1.msra.mxu0 0.0
    %126 = vmatprep.subr.mxu0 0.0
    %127 = vmatpush1.msra.mxu0 0.0
    %128 = vmatprep.subr.mxu0 0.0
    %129 = vmatpush1.msra.mxu0 0.0
    %130 = vmatprep.subr.mxu0 0.0
    %131 = vmatpush1.msra.mxu0 0.0
    %132 = vmatprep.subr.mxu0 0.0
    %133 = vmatpush1.msra.mxu0 0.0
    %134 = vmatprep.subr.mxu0 0.0
    %135 = vmatpush1.msra.mxu0 0.0
    %136 = vmatprep.subr.mxu0 0.0
    %137 = vmatpush1.msra.mxu0 0.0
    %138 = vmatprep.subr.mxu0 0.0
    %139 = vmatpush1.msra.mxu0 0.0
    %140 = vmatprep.subr.mxu0 0.0
    %141 = vmatpush1.msra.mxu0 0.0
    %142 = vmatprep.subr.mxu0 0.0
    %143 = vmatpush1.msra.mxu0 0.0
    %144 = vmatprep.subr.mxu0 0.0
    %145 = vmatpush1.msra.mxu0 0.0
    %146 = vmatprep.subr.mxu0 0.0
    %147 = vmatpush1.msra.mxu0 0.0
    %148 = vmatprep.subr.mxu0 0.0
    %149 = vmatpush1.msra.mxu0 0.0
    %150 = vmatprep.subr.mxu0 0.0
    %151 = vmatpush1.msra.mxu0 0.0
    %152 = vmatprep.subr.mxu0 0.0
    %153 = vmatpush1.msra.mxu0 0.0
    %154 = vmatprep.subr.mxu0 0.0
    %155 = vmatpush1.msra.mxu0 0.0
    %156 = vmatprep.subr.mxu0 0.0
    %157 = vmatpush1.msra.mxu0 0.0
    %158 = vmatprep.mubr.f32.mxu0 0.0
    %159 = vmatmul.mubr.f32.gmra.mrb[0].mxu0 %v89
    %v160 = vpop.f32.mrb[0].mxu0
    %v161 = vadd.f32 %v72, %v160
    %v162 = vpop.f32.mrb[0].mxu0
    %163 = vdwg.mxu0
    %vm164 = vcmp.ge.f32.partialorder %v161, 0.0
    %v165 = vmul.f32 %v161, 0.01
    %v166 = vsel %vm164, %v161, %v165
    %v167 = vld [vmem:[%s3] sm:$0xff]
    %v168 = vld [vmem:[%s4] sm:$0x1]
    %v170 = vlaneseq
    %v171 = vshrl.u32 %v170, 7
    %v172 = vsub.s32 0, %v171
    %v173 = vrot.slane %v168, %v172
    %vm175 = vcmask 64512
    %v177 = vsel %vm175, %v166, 0
    %179 = vmatprep.subr.mxu0 0.0
    %180 = vmatpush1.msra.mxu0 %v167
    %181 = vmatprep.subr.mxu0 0.0
    %182 = vmatpush1.msra.mxu0 0.0
    %183 = vmatprep.subr.mxu0 0.0
    %184 = vmatpush1.msra.mxu0 0.0
    %185 = vmatprep.subr.mxu0 0.0
    %186 = vmatpush1.msra.mxu0 0.0
    %187 = vmatprep.subr.mxu0 0.0
    %188 = vmatpush1.msra.mxu0 0.0
    %189 = vmatprep.subr.mxu0 0.0
    %190 = vmatpush1.msra.mxu0 0.0
    %191 = vmatprep.subr.mxu0 0.0
    %192 = vmatpush1.msra.mxu0 0.0
    %193 = vmatprep.subr.mxu0 0.0
    %194 = vmatpush1.msra.mxu0 0.0
    %195 = vmatprep.subr.mxu0 0.0
    %196 = vmatpush1.msra.mxu0 0.0
    %197 = vmatprep.subr.mxu0 0.0
    %198 = vmatpush1.msra.mxu0 0.0
    %199 = vmatprep.subr.mxu0 0.0
    %200 = vmatpush1.msra.mxu0 0.0
    %201 = vmatprep.subr.mxu0 0.0
    %202 = vmatpush1.msra.mxu0 0.0
    %203 = vmatprep.subr.mxu0 0.0
    %204 = vmatpush1.msra.mxu0 0.0
    %205 = vmatprep.subr.mxu0 0.0
    %206 = vmatpush1.msra.mxu0 0.0
    %207 = vmatprep.subr.mxu0 0.0
    %208 = vmatpush1.msra.mxu0 0.0
    %209 = vmatprep.subr.mxu0 0.0
    %210 = vmatpush1.msra.mxu0 0.0
    %211 = vmatprep.subr.mxu0 0.0
    %212 = vmatpush1.msra.mxu0 0.0
    %213 = vmatprep.subr.mxu0 0.0
    %214 = vmatpush1.msra.mxu0 0.0
    %215 = vmatprep.subr.mxu0 0.0
    %216 = vmatpush1.msra.mxu0 0.0
    %217 = vmatprep.subr.mxu0 0.0
    %218 = vmatpush1.msra.mxu0 0.0
    %219 = vmatprep.subr.mxu0 0.0
    %220 = vmatpush1.msra.mxu0 0.0
    %221 = vmatprep.subr.mxu0 0.0
    %222 = vmatpush1.msra.mxu0 0.0
    %223 = vmatprep.subr.mxu0 0.0
    %224 = vmatpush1.msra.mxu0 0.0
    %225 = vmatprep.subr.mxu0 0.0
    %226 = vmatpush1.msra.mxu0 0.0
    %227 = vmatprep.subr.mxu0 0.0
    %228 = vmatpush1.msra.mxu0 0.0
    %229 = vmatprep.subr.mxu0 0.0
    %230 = vmatpush1.msra.mxu0 0.0
    %231 = vmatprep.subr.mxu0 0.0
    %232 = vmatpush1.msra.mxu0 0.0
    %233 = vmatprep.subr.mxu0 0.0
    %234 = vmatpush1.msra.mxu0 0.0
    %235 = vmatprep.subr.mxu0 0.0
    %236 = vmatpush1.msra.mxu0 0.0
    %237 = vmatprep.subr.mxu0 0.0
    %238 = vmatpush1.msra.mxu0 0.0
    %239 = vmatprep.subr.mxu0 0.0
    %240 = vmatpush1.msra.mxu0 0.0
    %241 = vmatprep.subr.mxu0 0.0
    %242 = vmatpush1.msra.mxu0 0.0
    %243 = vmatprep.mubr.f32.mxu0 0.0
    %244 = vmatmul.mubr.f32.gmra.mrb[0].mxu0 %v177
    %v245 = vpop.f32.mrb[0].mxu0
    %v246 = vadd.f32 %v173, %v245
    %v247 = vpop.f32.mrb[0].mxu0
    %248 = vdwg.mxu0
    %v251 = vlaneseq
    %v252 = vshrl.u32 %v251, 7
    %v253 = vsub.s32 %v77, %v252
    %v254 = vrot.slane %v58, %v253
    %v255 = vlaneseq
    %v256 = vshrl.u32 %v255, 7
    %v257 = vsub.s32 %v77, %v256
    %v258 = vrot.slane %v63, %v257
    %v259 = vsel %vm86, %v258, %v254
    %v260 = vsel %vm88, %v259, 0
    %262 = vmatprep.subr.mxu0 0.0
    %263 = vmatpush1.msra.mxu0 %v92
    %264 = vmatprep.subr.mxu0 0.0
    %265 = vmatpush1.msra.mxu0 0.0
    %266 = vmatprep.subr.mxu0 0.0
    %267 = vmatpush1.msra.mxu0 0.0
    %268 = vmatprep.subr.mxu0 0.0
    %269 = vmatpush1.msra.mxu0 0.0
    %270 = vmatprep.subr.mxu0 0.0
    %271 = vmatpush1.msra.mxu0 0.0
    %272 = vmatprep.subr.mxu0 0.0
    %273 = vmatpush1.msra.mxu0 0.0
    %274 = vmatprep.subr.mxu0 0.0
    %275 = vmatpush1.msra.mxu0 0.0
    %276 = vmatprep.subr.mxu0 0.0
    %277 = vmatpush1.msra.mxu0 0.0
    %278 = vmatprep.subr.mxu0 0.0
    %279 = vmatpush1.msra.mxu0 0.0
    %280 = vmatprep.subr.mxu0 0.0
    %281 = vmatpush1.msra.mxu0 0.0
    %282 = vmatprep.subr.mxu0 0.0
    %283 = vmatpush1.msra.mxu0 0.0
    %284 = vmatprep.subr.mxu0 0.0
    %285 = vmatpush1.msra.mxu0 0.0
    %286 = vmatprep.subr.mxu0 0.0
    %287 = vmatpush1.msra.mxu0 0.0
    %288 = vmatprep.subr.mxu0 0.0
    %289 = vmatpush1.msra.mxu0 0.0
    %290 = vmatprep.subr.mxu0 0.0
    %291 = vmatpush1.msra.mxu0 0.0
    %292 = vmatprep.subr.mxu0 0.0
    %293 = vmatpush1.msra.mxu0 0.0
    %294 = vmatprep.subr.mxu0 0.0
    %295 = vmatpush1.msra.mxu0 0.0
    %296 = vmatprep.subr.mxu0 0.0
    %297 = vmatpush1.msra.mxu0 0.0
    %298 = vmatprep.subr.mxu0 0.0
    %299 = vmatpush1.msra.mxu0 0.0
    %300 = vmatprep.subr.mxu0 0.0
    %301 = vmatpush1.msra.mxu0 0.0
    %302 = vmatprep.subr.mxu0 0.0
    %303 = vmatpush1.msra.mxu0 0.0
    %304 = vmatprep.subr.mxu0 0.0
    %305 = vmatpush1.msra.mxu0 0.0
    %306 = vmatprep.subr.mxu0 0.0
    %307 = vmatpush1.msra.mxu0 0.0
    %308 = vmatprep.subr.mxu0 0.0
    %309 = vmatpush1.msra.mxu0 0.0
    %310 = vmatprep.subr.mxu0 0.0
    %311 = vmatpush1.msra.mxu0 0.0
    %312 = vmatprep.subr.mxu0 0.0
    %313 = vmatpush1.msra.mxu0 0.0
    %314 = vmatprep.subr.mxu0 0.0
    %315 = vmatpush1.msra.mxu0 0.0
    %316 = vmatprep.subr.mxu0 0.0
    %317 = vmatpush1.msra.mxu0 0.0
    %318 = vmatprep.subr.mxu0 0.0
    %319 = vmatpush1.msra.mxu0 0.0
    %320 = vmatprep.subr.mxu0 0.0
    %321 = vmatpush1.msra.mxu0 0.0
    %322 = vmatprep.subr.mxu0 0.0
    %323 = vmatpush1.msra.mxu0 0.0
    %324 = vmatprep.subr.mxu0 0.0
    %325 = vmatpush1.msra.mxu0 0.0
    %326 = vmatprep.mubr.f32.mxu0 0.0
    %327 = vmatmul.mubr.f32.gmra.mrb[0].mxu0 %v260
    %v328 = vpop.f32.mrb[0].mxu0
    %v329 = vadd.f32 %v72, %v328
    %v330 = vpop.f32.mrb[0].mxu0
    %331 = vdwg.mxu0
    %vm332 = vcmp.ge.f32.partialorder %v329, 0.0
    %v333 = vmul.f32 %v329, 0.01
    %v334 = vsel %vm332, %v329, %v333
    %v336 = vsel %vm175, %v334, 0
    %338 = vmatprep.subr.mxu0 0.0
    %339 = vmatpush1.msra.mxu0 %v167
    %340 = vmatprep.subr.mxu0 0.0
    %341 = vmatpush1.msra.mxu0 0.0
    %342 = vmatprep.subr.mxu0 0.0
    %343 = vmatpush1.msra.mxu0 0.0
    %344 = vmatprep.subr.mxu0 0.0
    %345 = vmatpush1.msra.mxu0 0.0
    %346 = vmatprep.subr.mxu0 0.0
    %347 = vmatpush1.msra.mxu0 0.0
    %348 = vmatprep.subr.mxu0 0.0
    %349 = vmatpush1.msra.mxu0 0.0
    %350 = vmatprep.subr.mxu0 0.0
    %351 = vmatpush1.msra.mxu0 0.0
    %352 = vmatprep.subr.mxu0 0.0
    %353 = vmatpush1.msra.mxu0 0.0
    %354 = vmatprep.subr.mxu0 0.0
    %355 = vmatpush1.msra.mxu0 0.0
    %356 = vmatprep.subr.mxu0 0.0
    %357 = vmatpush1.msra.mxu0 0.0
    %358 = vmatprep.subr.mxu0 0.0
    %359 = vmatpush1.msra.mxu0 0.0
    %360 = vmatprep.subr.mxu0 0.0
    %361 = vmatpush1.msra.mxu0 0.0
    %362 = vmatprep.subr.mxu0 0.0
    %363 = vmatpush1.msra.mxu0 0.0
    %364 = vmatprep.subr.mxu0 0.0
    %365 = vmatpush1.msra.mxu0 0.0
    %366 = vmatprep.subr.mxu0 0.0
    %367 = vmatpush1.msra.mxu0 0.0
    %368 = vmatprep.subr.mxu0 0.0
    %369 = vmatpush1.msra.mxu0 0.0
    %370 = vmatprep.subr.mxu0 0.0
    %371 = vmatpush1.msra.mxu0 0.0
    %372 = vmatprep.subr.mxu0 0.0
    %373 = vmatpush1.msra.mxu0 0.0
    %374 = vmatprep.subr.mxu0 0.0
    %375 = vmatpush1.msra.mxu0 0.0
    %376 = vmatprep.subr.mxu0 0.0
    %377 = vmatpush1.msra.mxu0 0.0
    %378 = vmatprep.subr.mxu0 0.0
    %379 = vmatpush1.msra.mxu0 0.0
    %380 = vmatprep.subr.mxu0 0.0
    %381 = vmatpush1.msra.mxu0 0.0
    %382 = vmatprep.subr.mxu0 0.0
    %383 = vmatpush1.msra.mxu0 0.0
    %384 = vmatprep.subr.mxu0 0.0
    %385 = vmatpush1.msra.mxu0 0.0
    %386 = vmatprep.subr.mxu0 0.0
    %387 = vmatpush1.msra.mxu0 0.0
    %388 = vmatprep.subr.mxu0 0.0
    %389 = vmatpush1.msra.mxu0 0.0
    %390 = vmatprep.subr.mxu0 0.0
    %391 = vmatpush1.msra.mxu0 0.0
    %392 = vmatprep.subr.mxu0 0.0
    %393 = vmatpush1.msra.mxu0 0.0
    %394 = vmatprep.subr.mxu0 0.0
    %395 = vmatpush1.msra.mxu0 0.0
    %396 = vmatprep.subr.mxu0 0.0
    %397 = vmatpush1.msra.mxu0 0.0
    %398 = vmatprep.subr.mxu0 0.0
    %399 = vmatpush1.msra.mxu0 0.0
    %400 = vmatprep.subr.mxu0 0.0
    %401 = vmatpush1.msra.mxu0 0.0
    %402 = vmatprep.mubr.f32.mxu0 0.0
    %403 = vmatmul.mubr.f32.gmra.mrb[0].mxu0 %v336
    %v404 = vpop.f32.mrb[0].mxu0
    %v405 = vadd.f32 %v173, %v404
    %v406 = vpop.f32.mrb[0].mxu0
    %407 = vdwg.mxu0
    %v408 = vadd.f32 %v246, %v405
    %v409 = vxor.u32 %v408, 2147483648
    %v410 = vmul.f32 %v409, 1.442695
    %v411 = vpow.pop %v410
    %v412 = vadd.f32 %v411, 1.0
    %v413 = vrcp.pop %v412
    %v414 = vmul.f32 1.0, %v413
    %v415 = vlaneseq
    %v416 = vshrl.u32 %v415, 7
    %v417 = vsub.s32 0, %v416
    %v418 = vrot.slane %v414, %v417
    %420 = vbcast.lane.b32.xlu0 %v418, 256
    %v421 = vpop.permute.xlu0 %420
    %v422 = vlaneseq
    %v423 = vshrl.u32 %v422, 7
    %v424 = vsub.s32 1, %v423
    %v425 = vrot.slane %v414, %v424
    %427 = vbcast.lane.b32.xlu0 %v425, 256
    %v428 = vpop.permute.xlu0 %427
    %v432 = vunpack.c.l.s4 839922192
    %v433 = vunpack.c.0.s8 %v432
    %v434 = vlaneseq
    %v435 = vshrl.u32 %v434, 7
    %v436 = vsub.s32 %v433, %v435
    %v437 = vrot.slane %v421, %v436
    %v439 = vunpack.c.l.s4 839922192
    %v440 = vunpack.c.0.s8 %v439
    %v441 = vlaneseq
    %v442 = vshrl.u32 %v441, 7
    %v443 = vsub.s32 %v440, %v442
    %v444 = vrot.slane %v428, %v443
    %v447 = vmul.f32 %v35, %v437
    %v448 = vmul.f32 %v36, %v444
    %449 = vst [vmem:[#allocation5] sm:$0xff] %v447
    %450 = vst [vmem:[#allocation5 + $0x8] sm:$0xff] %v448
    // Predicated region
    $region26: #{tpu_custom_call.1} parent=1 // pred_check
      _
    $region27: #{tpu_custom_call.1} parent=1 // pred_check_branch
      %452 = sbr.rel (0) target = $region29
    $region28: #{tpu_custom_call.1} parent=1 // pred_region
      %s454 = ssub.s32 256, 256
      %455 = vsyncadd [#allocation4], %s454
      %s456 = sshll.u32 [#allocation5], 4
      %s457 = int_to_ptr.vmem [resolvable:$true] %s456
      %462 = dma.vmem_to_hbm [thread:$0]  %s457, 256, %s5, [#allocation4], 128, 128, 8
    $region29: #{tpu_custom_call.1} parent=1 // pred_fallthru
      _
    // Predicated region
    $region30: #{tpu_custom_call.1} parent=1 // pred_check
      _
    $region31: #{tpu_custom_call.1} parent=1 // pred_check_branch
      %464 = sbr.rel (0) target = $region33
    $region32: #{tpu_custom_call.1} parent=1 // pred_region
      %465 = dma.done [#allocation4], 256
    $region33: #{tpu_custom_call.1} parent=1 // pred_fallthru
      _
    %466 = vsyncpa [#allocation3], 1
    %467 = vsyncpa [#allocation4], 1

</llo_original>
